<compile_context>
chip_gen: v5e
topology: v5e:2x2
jax: 0.10.0
libtpu: 0.0.40
codegen_flags: <defaults>
</compile_context>

<pallas_src>
import functools
import math

import jax
import jax.numpy as jnp
from jax import lax
from jax.experimental import pallas as pl
from jax.experimental.pallas import tpu as pltpu


def _round_up(x: int, m: int) -> int:
    return ((x + m - 1) // m) * m


# ---------------------------------------------------------------------------
# Tiled matmul kernel:  out = x @ w^T   (w kept in PyTorch (N, K) layout)
# ---------------------------------------------------------------------------
def _matmul_kernel(x_ref, w_ref, o_ref, acc_ref):
    @pl.when(pl.program_id(2) == 0)
    def _():
        acc_ref[...] = jnp.zeros_like(acc_ref)

    # x: (tm, tk), w: (tn, tk) -> contract the K dim of both (no transpose needed).
    acc_ref[...] += lax.dot_general(
        x_ref[...], w_ref[...],
        dimension_numbers=(((1,), (1,)), ((), ())),
        preferred_element_type=jnp.float32,
    )

    @pl.when(pl.program_id(2) == pl.num_programs(2) - 1)
    def _():
        o_ref[...] = acc_ref[...].astype(o_ref.dtype)


def linear(x2d, w, *, tm=512, tn=512, tk=512):
    """x2d: (M, K); w: (N, K) [PyTorch Linear layout]. Returns x2d @ w.T -> (M, N)."""
    M, K = x2d.shape
    N, K2 = w.shape
    assert K == K2

    # Sublane-aligned rows (x8), lane-dense cols (x128); shrink tiles for small
    # problems.  Zero padding is exact for matmul.
    tm = min(tm, _round_up(M, 8))
    tn = min(tn, _round_up(N, 128))
    tk = min(tk, _round_up(K, 128))
    Mp, Kp, Np = _round_up(M, tm), _round_up(K, tk), _round_up(N, tn)

    xp = x2d if (Mp, Kp) == (M, K) else jnp.pad(x2d, ((0, Mp - M), (0, Kp - K)))
    wp = w if (Np, Kp) == (N, K) else jnp.pad(w, ((0, Np - N), (0, Kp - K)))

    out = pl.pallas_call(
        _matmul_kernel,
        out_shape=jax.ShapeDtypeStruct((Mp, Np), x2d.dtype),
        grid_spec=pltpu.PrefetchScalarGridSpec(
            num_scalar_prefetch=0,
            grid=(Mp // tm, Np // tn, Kp // tk),
            in_specs=[
                pl.BlockSpec((tm, tk), lambda i, j, k: (i, k)),
                pl.BlockSpec((tn, tk), lambda i, j, k: (j, k)),
            ],
            out_specs=pl.BlockSpec((tm, tn), lambda i, j, k: (i, j)),
            scratch_shapes=[pltpu.VMEM((tm, tn), jnp.float32)],
        ),
        compiler_params=pltpu.CompilerParams(
            dimension_semantics=("parallel", "parallel", "arbitrary")),
    )(xp, wp)
    if (Mp, Np) == (M, N):
        return out
    return out[:M, :N]


# ---------------------------------------------------------------------------
# Head-packed causal flash-attention kernel.
# Blocks are (tile, D) slabs of the packed (B, S, H*dh) projection output; heads
# are processed with an unrolled static loop so no head transposes are needed.
# ---------------------------------------------------------------------------
def _flash_attn_kernel(q_ref, k_ref, v_ref, o_ref, m_sc, l_sc, acc_sc,
                       *, sm_scale, num_heads, d_head, t, seq_len):
    qi = pl.program_id(1)
    ki = pl.program_id(2)

    @pl.when(ki == 0)
    def _():
        m_sc[...] = jnp.full_like(m_sc, -1e30)
        l_sc[...] = jnp.zeros_like(l_sc)
        acc_sc[...] = jnp.zeros_like(acc_sc)

    # Skip kv tiles that are entirely above the causal diagonal or entirely in
    # the sequence padding (~2x fewer FLOPs for causal attention).
    @pl.when((ki <= qi) & (ki * t < seq_len))
    def _():
        # Causal + padding mask, built once per tile and shared by all heads.
        q_pos = qi * t + lax.broadcasted_iota(jnp.int32, (t, t), 0)
        kv_pos = ki * t + lax.broadcasted_iota(jnp.int32, (t, t), 1)
        valid = (q_pos >= kv_pos) & (kv_pos < seq_len)
        neg = jnp.float32(-1e30)

        q = q_ref[...]          # (t, D) lane-dense load
        k = k_ref[...]
        v = v_ref[...]

        for h in range(num_heads):                     # static unroll
            sl = slice(h * d_head, (h + 1) * d_head)
            qh = q[:, sl]                              # (t, dh)
            kh = k[:, sl]
            vh = v[:, sl]

            # Q K^T, contracting the head dim of both operands directly.
            s = lax.dot_general(
                qh, kh, dimension_numbers=(((1,), (1,)), ((), ())),
                preferred_element_type=jnp.float32) * sm_scale
            s = jnp.where(valid, s, neg)

            m_prev = m_sc[h]                           # (t, 1)
            m_new = jnp.maximum(m_prev, s.max(axis=-1, keepdims=True))
            alpha = jnp.exp(m_prev - m_new)
            p = jnp.exp(s - m_new)                     # (t, t)

            l_sc[h] = alpha * l_sc[h] + p.sum(axis=-1, keepdims=True)
            acc_sc[h] = alpha * acc_sc[h] + jnp.dot(
                p.astype(vh.dtype), vh,
                preferred_element_type=jnp.float32)
            m_sc[h] = m_new

    @pl.when(ki == pl.num_programs(2) - 1)
    def _():
        for h in range(num_heads):
            inv_l = pl.reciprocal(l_sc[h], approx=True)
            o_ref[:, h * d_head:(h + 1) * d_head] = (
                acc_sc[h] * inv_l).astype(o_ref.dtype)


def causal_flash_attention(q, k, v, *, num_heads, sm_scale):
    """q, k, v: (B, S, D) with heads packed along D. Returns (B, S, D)."""
    B, S, D = q.shape
    assert D % num_heads == 0
    dh = D // num_heads

    t = min(128, _round_up(S, 8))
    Sp = _round_up(S, t)
    if Sp != S:
        pad = ((0, 0), (0, Sp - S), (0, 0))
        q, k, v = jnp.pad(q, pad), jnp.pad(k, pad), jnp.pad(v, pad)

    kernel = functools.partial(
        _flash_attn_kernel, sm_scale=sm_scale, num_heads=num_heads,
        d_head=dh, t=t, seq_len=S)

    out = pl.pallas_call(
        kernel,
        out_shape=jax.ShapeDtypeStruct((B, Sp, D), q.dtype),
        grid_spec=pltpu.PrefetchScalarGridSpec(
            num_scalar_prefetch=0,
            grid=(B, Sp // t, Sp // t),
            in_specs=[
                pl.BlockSpec((None, t, D), lambda b, i, j: (b, i, 0)),
                pl.BlockSpec((None, t, D), lambda b, i, j: (b, j, 0)),
                pl.BlockSpec((None, t, D), lambda b, i, j: (b, j, 0)),
            ],
            out_specs=pl.BlockSpec((None, t, D), lambda b, i, j: (b, i, 0)),
            scratch_shapes=[
                pltpu.VMEM((num_heads, t, 1), jnp.float32),    # running max m
                pltpu.VMEM((num_heads, t, 1), jnp.float32),    # running denom l
                pltpu.VMEM((num_heads, t, dh), jnp.float32),   # per-head accumulator
            ],
        ),
        compiler_params=pltpu.CompilerParams(
            dimension_semantics=("parallel", "parallel", "arbitrary")),
    )(q, k, v)
    if Sp == S:
        return out
    return out[:, :S, :]


# ---------------------------------------------------------------------------
# Full MultiheadSelfAttention forward (rope_module=None path)
# ---------------------------------------------------------------------------
def multihead_self_attention(x, wq, wk, wv, wo, num_heads):
    """x: (B, S, D); weights: (D, D) in PyTorch (out, in) layout. Returns (B, S, D)."""
    B, S, D = x.shape
    assert D % num_heads == 0
    dh = D // num_heads

    x2 = x.reshape(B * S, D)

    # Fused Q/K/V projection: one matmul, x read once.
    w_qkv = jnp.concatenate([wq, wk, wv], axis=0)          # (3D, D)
    qkv = linear(x2, w_qkv)                                # (B*S, 3D)
    q = qkv[:, :D].reshape(B, S, D)
    k = qkv[:, D:2 * D].reshape(B, S, D)
    v = qkv[:, 2 * D:].reshape(B, S, D)

    # Head-packed attention output is already in (B, S, H*dh) = (B, S, D) layout.
    o = causal_flash_attention(q, k, v, num_heads=num_heads,
                               sm_scale=1.0 / math.sqrt(dh))

    out = linear(o.reshape(B * S, D), wo)
    return out.reshape(B, S, D)


# ---------------------------------------------------------------------------
# Pure-JAX reference (mirrors the PyTorch forward; default MXU precision)
# ---------------------------------------------------------------------------
def _reference_mhsa(x, wq, wk, wv, wo, num_heads):
    B, S, D = x.shape
    dh = D // num_heads

    def proj(w):
        y = jnp.einsum('bsd,nd->bsn', x, w)
        return y.reshape(B, S, num_heads, dh).transpose(0, 2, 1, 3)

    q, k, v = proj(wq), proj(wk), proj(wv)
    score = jnp.einsum('bhqd,bhkd->bhqk', q, k) / math.sqrt(dh)
    mask = jnp.tril(jnp.ones((S, S), dtype=bool))
    score = jnp.where(mask[None, None], score, -jnp.inf)
    prob = jax.nn.softmax(score, axis=-1)
    o = jnp.einsum('bhqk,bhkd->bhqd', prob, v)
    o = o.transpose(0, 2, 1, 3).reshape(B, S, D)
    return jnp.einsum('bsd,nd->bsn', o, wo)


if __name__ == "__main__":
    B, S, D, H = 2, 8, 32, 4   # batch, seq, d_model, num_heads (d_hidden = 8)

    key = jax.random.PRNGKey(0)
    kx, kq, kk, kv, ko = jax.random.split(key, 5)

    std = 2.0 / math.sqrt(D + D)  # Linear init: trunc_normal(std, [-3std, 3std])
    def init_w(k):
        return (std * jax.random.truncated_normal(k, -3.0, 3.0, (D, D))).astype(jnp.float32)

    wq, wk, wv, wo = init_w(kq), init_w(kk), init_w(kv), init_w(ko)
    x = jax.random.normal(kx, (B, S, D), dtype=jnp.float32)

    y = multihead_self_attention(x, wq, wk, wv, wo, H)
    y = jax.block_until_ready(y)

    ref = _reference_mhsa(x, wq, wk, wv, wo, H)
    assert y.shape == (B, S, D) and y.dtype == x.dtype
    max_err = float(jnp.max(jnp.abs(y - ref)))
    # Both kernel and reference use default (bf16-pass) MXU precision; tolerance
    # covers the unnormalized-vs-normalized PV rounding and approx reciprocal.
    assert jnp.allclose(y, ref, atol=2e-2, rtol=2e-2), f"max abs err {max_err}"

    print("KERNEL_OK")
</pallas_src>

<mosaic_0001>
module attributes {stable_mosaic.version = 11 : i64} {
  func.func @_matmul_kernel(%arg0: i32, %arg1: i32, %arg2: i32, %arg3: memref<16x128xf32, #tpu.memory_space<vmem>>, %arg4: memref<128x128xf32, #tpu.memory_space<vmem>>, %arg5: memref<16x128xf32, #tpu.memory_space<vmem>>, %arg6: memref<16x128xf32, #tpu.memory_space<vmem>>) attributes {dimension_semantics = [#tpu.dimension_semantics<parallel>, #tpu.dimension_semantics<parallel>, #tpu.dimension_semantics<arbitrary>], iteration_bounds = array<i64: 1, 1, 1>, scalar_prefetch = 0 : i64, scratch_operands = 1 : i64, tpu.core_type = #tpu.core_type<tc>, window_params = [{transform_indices = @transform_0, window_bounds = array<i64: 16, 128>}, {transform_indices = @transform_1, window_bounds = array<i64: 128, 128>}, {transform_indices = @transform_2, window_bounds = array<i64: 16, 128>}]} {
    %c0_i32 = arith.constant 0 : i32
    %0 = arith.cmpi eq, %arg2, %c0_i32 : i32
    %1 = arith.extui %0 : i1 to i32
    %c0_i32_0 = arith.constant 0 : i32
    %2 = arith.cmpi ne, %1, %c0_i32_0 : i32
    scf.if %2 {
      %cst_10 = arith.constant 0.000000e+00 : f32
      %12 = vector.broadcast %cst_10 : f32 to vector<16x128xf32>
      %c0_11 = arith.constant 0 : index
      %c0_12 = arith.constant 0 : index
      %13 = vector.load %arg6[%c0_11, %c0_12] : memref<16x128xf32, #tpu.memory_space<vmem>>, vector<16x128xf32>
      tpu.vector_store %arg6[%c0_11, %c0_12], %12 {strides = array<i32>} : memref<16x128xf32, #tpu.memory_space<vmem>>, vector<16x128xf32>,
    } else {
    }
    %c0 = arith.constant 0 : index
    %c0_1 = arith.constant 0 : index
    %3 = vector.load %arg6[%c0, %c0_1] : memref<16x128xf32, #tpu.memory_space<vmem>>, vector<16x128xf32>
    %c0_2 = arith.constant 0 : index
    %c0_3 = arith.constant 0 : index
    %4 = vector.load %arg3[%c0_2, %c0_3] : memref<16x128xf32, #tpu.memory_space<vmem>>, vector<16x128xf32>
    %c0_4 = arith.constant 0 : index
    %c0_5 = arith.constant 0 : index
    %5 = vector.load %arg4[%c0_4, %c0_5] : memref<128x128xf32, #tpu.memory_space<vmem>>, vector<128x128xf32>
    %cst = arith.constant dense<0.000000e+00> : vector<16x128xf32>
    %6 = tpu.matmul %4, %5, %cst {dimension_numbers = #tpu.dot_dimension_numbers<[1], [1], [0], [0], [0, 0, 1, 0], [], []>} : vector<16x128xf32>, vector<128x128xf32>, vector<16x128xf32> -> vector<16x128xf32>
    %7 = arith.addf %3, %6 : vector<16x128xf32>
    %c0_6 = arith.constant 0 : index
    %c0_7 = arith.constant 0 : index
    %8 = vector.load %arg6[%c0_6, %c0_7] : memref<16x128xf32, #tpu.memory_space<vmem>>, vector<16x128xf32>
    tpu.vector_store %arg6[%c0_6, %c0_7], %7 {strides = array<i32>} : memref<16x128xf32, #tpu.memory_space<vmem>>, vector<16x128xf32>,
    %c0_i32_8 = arith.constant 0 : i32
    %9 = arith.cmpi eq, %arg2, %c0_i32_8 : i32
    %10 = arith.extui %9 : i1 to i32
    %c0_i32_9 = arith.constant 0 : i32
    %11 = arith.cmpi ne, %10, %c0_i32_9 : i32
    scf.if %11 {
      %c0_10 = arith.constant 0 : index
      %c0_11 = arith.constant 0 : index
      %12 = vector.load %arg6[%c0_10, %c0_11] : memref<16x128xf32, #tpu.memory_space<vmem>>, vector<16x128xf32>
      %c0_12 = arith.constant 0 : index
      %c0_13 = arith.constant 0 : index
      %13 = vector.load %arg5[%c0_12, %c0_13] : memref<16x128xf32, #tpu.memory_space<vmem>>, vector<16x128xf32>
      tpu.vector_store %arg5[%c0_12, %c0_13], %12 {strides = array<i32>} : memref<16x128xf32, #tpu.memory_space<vmem>>, vector<16x128xf32>,
    } else {
    }
    return
  }
  func.func @transform_0(%arg0: i32, %arg1: i32, %arg2: i32) -> (i32, i32) {
    %c0_i32 = arith.constant 0 : i32
    return %arg0, %arg2 : i32, i32
  }
  func.func @transform_1(%arg0: i32, %arg1: i32, %arg2: i32) -> (i32, i32) {
    %c0_i32 = arith.constant 0 : i32
    return %arg1, %arg2 : i32, i32
  }
  func.func @transform_2(%arg0: i32, %arg1: i32, %arg2: i32) -> (i32, i32) {
    %c0_i32 = arith.constant 0 : i32
    return %arg0, %arg1 : i32, i32
  }
}

</mosaic_0001>

<llo_original>
// kernel: tpu_custom_call.1
$region0: #{tpu_custom_call.1}
  #allocation0 [shape = 'u32[]', space=smem, size = 0x4, offset = 0x4, fixed_abs, tag = 'smem constant byte address 0x4 - core index']
  #allocation1 [shape = 'u32[72,128]{1,0:T(1,128)}', space=vmem, size = 0x9000, scoped, tag = 'internal scratch']
  #allocation2 [shape = 'f32[16,128]{1,0:T(8,128)}', space=vmem, size = 0x2000, scoped, tag = 'scratch operand']
  %s0 = inlined_call_operand.hbm [shape: f32[16,128], index: 0, kind: input, shape index: {}]
  %s1 = inlined_call_operand.hbm [shape: f32[128,128], index: 1, kind: input, shape index: {}]
  %s2 = inlined_call_operand.hbm [shape: f32[16,128], index: 2, kind: output, shape index: {}]
  %s3 = sld [smem:[#allocation0]]
  $region34: #{tpu_custom_call.1} parent=0
    _
  %s5 = ssub.s32 1, %s3
  %s6 = scalar_select 0, %s5, %s3
  $region1: #{tpu_custom_call.1} parent=0
    #allocation3 [shape = 'u8[8192]{0}', space=vmem, size = 0x2000, scoped, tag = 'input window, operand 0, single buffered']
    #allocation4 [shape = 's32[1]{0}', space=sflag, size = 0x4, scoped, tag = 'scoped memory for tpu_custom_call.1']
    #allocation5 [shape = 's32[1]{0}', space=sflag, size = 0x4, scoped, tag = 'scoped memory for tpu_custom_call.1']
    #allocation6 [shape = 'u8[65536]{0}', space=vmem, size = 0x10000, scoped, tag = 'input window, operand 1, single buffered']
    #allocation7 [shape = 's32[1]{0}', space=sflag, size = 0x4, scoped, tag = 'scoped memory for tpu_custom_call.1']
    #allocation8 [shape = 'u8[8192]{0}', space=vmem, size = 0x2000, scoped, tag = 'output window, operand 0, single buffered']
    %7 = vsyncpa [#allocation4], 0
    %8 = vsyncpa [#allocation7], 0
    %9 = vsyncpa [#allocation5], 0
    // Predicated region
    $region2: #{tpu_custom_call.1} parent=1 // pred_check
      _
    $region3: #{tpu_custom_call.1} parent=1 // pred_check_branch
      %11 = sbr.rel (0) target = $region5
    $region4: #{tpu_custom_call.1} parent=1 // pred_region
      %13 = vsyncadd [#allocation4], 0
      %s14 = sshll.u32 %s0, 4
      %s15 = int_to_ptr.hbm [resolvable:$true] %s14
      %s16 = sshll.u32 [#allocation3], 4
      %s17 = int_to_ptr.vmem [resolvable:$true] %s16
      %22 = dma.hbm_to_vmem [thread:$0]  %s15, 256, %s17, [#allocation4], 128, 128, 8
    $region5: #{tpu_custom_call.1} parent=1 // pred_fallthru
      _
    // Predicated region
    $region6: #{tpu_custom_call.1} parent=1 // pred_check
      _
    $region7: #{tpu_custom_call.1} parent=1 // pred_check_branch
      %24 = sbr.rel (0) target = $region9
    $region8: #{tpu_custom_call.1} parent=1 // pred_region
      %26 = vsyncadd [#allocation7], 0
      %s27 = sshll.u32 %s1, 4
      %s28 = int_to_ptr.hbm [resolvable:$true] %s27
      %s29 = sshll.u32 [#allocation6], 4
      %s30 = int_to_ptr.vmem [resolvable:$true] %s29
      %35 = dma.hbm_to_vmem [thread:$0]  %s28, 2048, %s30, [#allocation7], 128, 128, 8
    $region9: #{tpu_custom_call.1} parent=1 // pred_fallthru
      _
    // Predicated region
    $region10: #{tpu_custom_call.1} parent=1 // pred_check
      _
    $region11: #{tpu_custom_call.1} parent=1 // pred_check_branch
      %37 = sbr.rel (0) target = $region13
    $region12: #{tpu_custom_call.1} parent=1 // pred_region
      %39 = dma.done [#allocation4], 256
    $region13: #{tpu_custom_call.1} parent=1 // pred_fallthru
      _
    // Predicated region
    $region14: #{tpu_custom_call.1} parent=1 // pred_check
      _
    $region15: #{tpu_custom_call.1} parent=1 // pred_check_branch
      %41 = sbr.rel (0) target = $region17
    $region16: #{tpu_custom_call.1} parent=1 // pred_region
      %43 = dma.done [#allocation7], 2048
    $region17: #{tpu_custom_call.1} parent=1 // pred_fallthru
      _
    %p44 = scmp.eq.s32.totalorder 0, 0
    // Predicated region
    $region18: #{tpu_custom_call.1} parent=1 // pred_check
      %p45 = pneg %p44
    $region19: #{tpu_custom_call.1} parent=1 // pred_check_branch
      %47 = sbr.rel (%p45) target = $region21
    $region20: #{tpu_custom_call.1} parent=1 // pred_region
      %48 = vst [vmem:[#allocation2] sm:$0xff] 0.0
      %49 = vst [vmem:[#allocation2 + $0x8] sm:$0xff] 0.0
    $region21: #{tpu_custom_call.1} parent=1 // pred_fallthru
      _
    %v50 = vld [vmem:[#allocation2] sm:$0xff]
    %v51 = vld [vmem:[#allocation2 + $0x8] sm:$0xff]
    %v52 = vld [vmem:[#allocation3] sm:$0xff]
    %v53 = vld [vmem:[#allocation3 + $0x8] sm:$0xff]
    %v54 = vld [vmem:[#allocation6] sm:$0xff]
    %v55 = vld [vmem:[#allocation6 + $0x8] sm:$0xff]
    %v56 = vld [vmem:[#allocation6 + $0x10] sm:$0xff]
    %v57 = vld [vmem:[#allocation6 + $0x18] sm:$0xff]
    %v58 = vld [vmem:[#allocation6 + $0x20] sm:$0xff]
    %v59 = vld [vmem:[#allocation6 + $0x28] sm:$0xff]
    %v60 = vld [vmem:[#allocation6 + $0x30] sm:$0xff]
    %v61 = vld [vmem:[#allocation6 + $0x38] sm:$0xff]
    %v62 = vld [vmem:[#allocation6 + $0x40] sm:$0xff]
    %v63 = vld [vmem:[#allocation6 + $0x48] sm:$0xff]
    %v64 = vld [vmem:[#allocation6 + $0x50] sm:$0xff]
    %v65 = vld [vmem:[#allocation6 + $0x58] sm:$0xff]
    %v66 = vld [vmem:[#allocation6 + $0x60] sm:$0xff]
    %v67 = vld [vmem:[#allocation6 + $0x68] sm:$0xff]
    %v68 = vld [vmem:[#allocation6 + $0x70] sm:$0xff]
    %v69 = vld [vmem:[#allocation6 + $0x78] sm:$0xff]
    %70 = vmatpush.xpose.msra.mxu0 %v69
    %71 = vmatpush.xpose.msra.mxu0 %v68
    %72 = vmatpush.xpose.msra.mxu0 %v67
    %73 = vmatpush.xpose.msra.mxu0 %v66
    %74 = vmatpush.xpose.msra.mxu0 %v65
    %75 = vmatpush.xpose.msra.mxu0 %v64
    %76 = vmatpush.xpose.msra.mxu0 %v63
    %77 = vmatpush.xpose.msra.mxu0 %v62
    %78 = vmatpush.xpose.msra.mxu0 %v61
    %79 = vmatpush.xpose.msra.mxu0 %v60
    %80 = vmatpush.xpose.msra.mxu0 %v59
    %81 = vmatpush.xpose.msra.mxu0 %v58
    %82 = vmatpush.xpose.msra.mxu0 %v57
    %83 = vmatpush.xpose.msra.mxu0 %v56
    %84 = vmatpush.xpose.msra.mxu0 %v55
    %85 = vmatpush.xpose.msra.mxu0 %v54
    %86 = vmatmul.f32.gmra.mxu0 %v52
    %v87 = vpop.f32.mrf.mxu0
    %v88 = vadd.f32 0.0, %v87
    %89 = vmatmul.f32.gmra.mxu0 %v53
    %v90 = vpop.f32.mrf.mxu0
    %v91 = vadd.f32 0.0, %v90
    %92 = vdwg.mxu0
    %v93 = vadd.f32 %v50, %v88
    %v94 = vadd.f32 %v51, %v91
    %95 = vst [vmem:[#allocation2] sm:$0xff] %v93
    %96 = vst [vmem:[#allocation2 + $0x8] sm:$0xff] %v94
    // Predicated region
    $region22: #{tpu_custom_call.1} parent=1 // pred_check
      %p97 = pneg %p44
    $region23: #{tpu_custom_call.1} parent=1 // pred_check_branch
      %99 = sbr.rel (%p97) target = $region25
    $region24: #{tpu_custom_call.1} parent=1 // pred_region
      %v100 = vld [vmem:[#allocation2] sm:$0xff]
      %v101 = vld [vmem:[#allocation2 + $0x8] sm:$0xff]
      %102 = vst [vmem:[#allocation8] sm:$0xff] %v100
      %103 = vst [vmem:[#allocation8 + $0x8] sm:$0xff] %v101
    $region25: #{tpu_custom_call.1} parent=1 // pred_fallthru
      _
    // Predicated region
    $region26: #{tpu_custom_call.1} parent=1 // pred_check
      _
    $region27: #{tpu_custom_call.1} parent=1 // pred_check_branch
      %105 = sbr.rel (0) target = $region29
    $region28: #{tpu_custom_call.1} parent=1 // pred_region
      %107 = vsyncadd [#allocation5], 0
      %s108 = sshll.u32 [#allocation8], 4
      %s109 = int_to_ptr.vmem [resolvable:$true] %s108
      %s110 = sshll.u32 %s2, 4
      %s111 = int_to_ptr.hbm [resolvable:$true] %s110
      %116 = dma.vmem_to_hbm [thread:$0]  %s109, 256, %s111, [#allocation5], 128, 128, 8
    $region29: #{tpu_custom_call.1} parent=1 // pred_fallthru
      _
    // Predicated region
    $region30: #{tpu_custom_call.1} parent=1 // pred_check
      _
    $region31: #{tpu_custom_call.1} parent=1 // pred_check_branch
      %118 = sbr.rel (0) target = $region33
    $region32: #{tpu_custom_call.1} parent=1 // pred_region
      %120 = dma.done [#allocation5], 256
    $region33: #{tpu_custom_call.1} parent=1 // pred_fallthru
      _
    %121 = vsyncpa [#allocation4], 1
    %122 = vsyncpa [#allocation7], 1
    %123 = vsyncpa [#allocation5], 1

</llo_original>
